<compile_context>
chip_gen: v5e
topology: v5e:2x2
jax: 0.10.0
libtpu: 0.0.40
codegen_flags: <defaults>
</compile_context>

<pallas_src>
import functools

import jax
import jax.numpy as jnp
from jax.experimental import pallas as pl
from jax.experimental.pallas import tpu as pltpu

LANE = 128      # vreg lane width
SUBLANE = 8     # vreg sublane count (f32)


def _round_up(n, m):
    return ((n + m - 1) // m) * m


# ----------------------------- Pallas kernel ---------------------------------
def _hyper_kernel(layout, n_layers, z_dim, cmd_dim, z_ref, c_ref, p_ref, out_ref):
    """Fused net_w + net_b forward for one batch tile.

    All weights/biases live in one packed (rows, WMAX) VMEM buffer `p_ref`;
    `layout[i] = (w_row_off, w_rows, b_row_off)` are static Python ints, so every
    per-layer slice is a zero-cost static view.  Layer 0 is split into a z part and
    a command part so the inputs never need to be concatenated.
    """
    w0_off, _w0_rows, b0_off = layout[0]
    w0z = p_ref[w0_off : w0_off + z_dim, :]
    b0 = p_ref[b0_off : b0_off + 1, :]
    h = jnp.dot(z_ref[...], w0z, preferred_element_type=jnp.float32)
    if cmd_dim == 1:
        # (B,1) command: a VPU broadcast-mul beats a degenerate K=1 MXU matmul.
        w0c = p_ref[w0_off + z_dim : w0_off + z_dim + 1, :]
        h = h + c_ref[...] * w0c
    else:
        w0c = p_ref[w0_off + z_dim : w0_off + z_dim + cmd_dim, :]
        h = h + jnp.dot(c_ref[...], w0c, preferred_element_type=jnp.float32)
    h = h + b0
    if n_layers > 1:
        h = jnp.maximum(h, 0.0)

    for i in range(1, n_layers):                 # static unroll for LLO visibility
        w_off, w_rows, b_off = layout[i]
        w = p_ref[w_off : w_off + w_rows, :]
        b = p_ref[b_off : b_off + 1, :]
        h = jnp.dot(h, w, preferred_element_type=jnp.float32) + b
        if i < n_layers - 1:                     # ReLU between layers, Identity at end
            h = jnp.maximum(h, 0.0)
    out_ref[...] = h.astype(out_ref.dtype)


# ----------------------------- call wrapper -----------------------------------
def _pick_tile_b(batch):
    """Generation-aware batch tile for the large-batch (grid) path."""
    kind = ""
    try:
        kind = jax.devices()[0].device_kind.lower()
    except Exception:
        pass
    if "v7" in kind or "7x" in kind:
        # v7x: 2 TensorCores + 64 MiB VMEM -> keep >= 4 grid steps, cap the tile.
        tile = min(2048, max(512, pl.cdiv(batch, 4)))
    else:
        # v5e / v6e: single TC, 128 MiB VMEM -> big tiles amortize per-step overhead.
        tile = min(4096, batch)
    return _round_up(tile, SUBLANE)


def hyper_mlp_pallas(z, command, packed, layout, wmax, *, tile_b=None,
                     small_batch_max=1024):
    """Fused hypernetwork MLP.  Returns the padded (B, wmax) output."""
    batch, z_dim = z.shape
    cmd_dim = command.shape[1]
    n_layers = len(layout)
    kernel = functools.partial(_hyper_kernel, layout, n_layers, z_dim, cmd_dim)

    if batch <= small_batch_max:
        # Latency-bound path: no grid, single step, everything lives in VMEM.
        return pl.pallas_call(
            kernel,
            out_shape=jax.ShapeDtypeStruct((batch, wmax), jnp.float32),
            in_specs=[pl.BlockSpec(memory_space=pltpu.MemorySpace.VMEM)] * 3,
            out_specs=pl.BlockSpec(memory_space=pltpu.MemorySpace.VMEM),
        )(z, command, packed)

    if tile_b is None:
        tile_b = _pick_tile_b(batch)

    # Large-batch path: tile the batch axis so Pallas double-buffers the z/command/out
    # tiles while the packed weights stay VMEM-resident (constant index_map).  Grid
    # steps are independent -> "parallel" for megacore sharding on v7x.
    # Ragged last tile (batch % tile_b != 0) is fine: rows are independent and Pallas
    # masks the out-of-range writes.
    in_specs = [
        pl.BlockSpec((tile_b, z_dim), lambda i: (i, 0)),
        pl.BlockSpec((tile_b, cmd_dim), lambda i: (i, 0)),
        pl.BlockSpec(packed.shape, lambda i: (0, 0)),   # constant -> resident, no re-DMA
    ]
    out_specs = pl.BlockSpec((tile_b, wmax), lambda i: (i, 0))

    return pl.pallas_call(
        kernel,
        out_shape=jax.ShapeDtypeStruct((batch, wmax), jnp.float32),
        grid=(pl.cdiv(batch, tile_b),),
        in_specs=in_specs,
        out_specs=out_specs,
        compiler_params=pltpu.CompilerParams(
            dimension_semantics=("parallel",),
            vmem_limit_bytes=32 * 1024 * 1024,
        ),
    )(z, command, packed)


# ----------------------------- module wrapper ----------------------------------
def _init_linear(key, fan_in, fan_out):
    """Deterministic init mimicking torch.nn.Linear's U(-1/sqrt(in), 1/sqrt(in))."""
    kw, kb = jax.random.split(key)
    bound = 1.0 / jnp.sqrt(jnp.float32(fan_in))
    w = jax.random.uniform(kw, (fan_in, fan_out), jnp.float32, -bound, bound)
    b = jax.random.uniform(kb, (1, fan_out), jnp.float32, -bound, bound)
    return w, b


def _block_diag(a, b):
    top = jnp.concatenate([a, jnp.zeros((a.shape[0], b.shape[1]), a.dtype)], axis=1)
    bot = jnp.concatenate([jnp.zeros((b.shape[0], a.shape[1]), b.dtype), b], axis=1)
    return jnp.concatenate([top, bot], axis=0)


def _pad2(x, rows, cols):
    return jnp.pad(x, ((0, rows - x.shape[0]), (0, cols - x.shape[1])))


class HyperNetworkPallas:
    """JAX/Pallas port of HyperNetwork: net_w and net_b fused into one padded MLP."""

    def __init__(self, hidden_sizes, z_dim_w=8, z_dim_b=8,
                 out_size_w=(8, 8), out_size_b=8, *, key):
        # NOTE: in the original module both nets consume cat([z, command], dim=1),
        # so z_dim_w / z_dim_b must equal dim(z) + dim(command) for forward() to run.
        assert z_dim_w == z_dim_b, "fused kernel requires a single shared input dim"
        self.z_dim_w = z_dim_w
        self.z_dim_b = z_dim_b
        self.out_size_w = list(out_size_w)
        self.out_size_b = out_size_b
        self.total_el_w = out_size_w[0] * out_size_w[1]
        self.out_true = self.total_el_w + self.out_size_b   # real (unpadded) output lanes

        sizes_w = [z_dim_w] + list(hidden_sizes) + [self.total_el_w]
        sizes_b = [z_dim_b] + list(hidden_sizes) + [self.out_size_b]

        keys = jax.random.split(key, len(sizes_w) - 1 + len(sizes_b) - 1)
        ki = 0
        self.params_w = []
        for i in range(len(sizes_w) - 1):
            self.params_w.append(_init_linear(keys[ki], sizes_w[i], sizes_w[i + 1]))
            ki += 1
        self.params_b = []
        for i in range(len(sizes_b) - 1):
            self.params_b.append(_init_linear(keys[ki], sizes_b[i], sizes_b[i + 1]))
            ki += 1

        # ---- Fuse net_w / net_b into one matmul chain, padded lane-dense to WMAX ----
        #   layer 0:  W = [W_w | W_b]           (in,  hw+hb) -> pad cols to WMAX
        #   layer i:  W = blockdiag(W_w, W_b)   (prev, cur)  -> pad rows & cols to WMAX
        # Block-diagonal / zero padding means the two halves never mix and padded lanes
        # stay exactly zero through every bias/ReLU, so the math is identical to running
        # the nets separately — but every VPU op and the output store is full-width.
        n_layers = len(self.params_w)
        fused_widths = [sizes_w[i + 1] + sizes_b[i + 1] for i in range(n_layers)]
        self.wmax = max(_round_up(w, LANE) for w in fused_widths)   # 128 for this config

        fused = []
        for i in range(n_layers):
            ww, bw = self.params_w[i]
            wb, bb = self.params_b[i]
            if i == 0:
                wf = jnp.concatenate([ww, wb], axis=1)
                in_rows = z_dim_w
            else:
                wf = _block_diag(ww, wb)
                in_rows = self.wmax          # previous activation is already WMAX wide
            bf = jnp.concatenate([bw, bb], axis=1)
            fused.append((_pad2(wf, in_rows, self.wmax), _pad2(bf, 1, self.wmax)))

        # ---- Pack all layers into ONE contiguous (rows, WMAX) buffer (single DMA) ----
        blocks, layout, row = [], [], 0
        for wf, bf in fused:
            w_rows = wf.shape[0]
            w_alloc = _round_up(w_rows, SUBLANE)   # keep every block sublane-aligned
            layout.append((row, w_rows, row + w_alloc))
            blocks.append(_pad2(wf, w_alloc, self.wmax))
            blocks.append(_pad2(bf, SUBLANE, self.wmax))
            row += w_alloc + SUBLANE
        self.packed = jnp.concatenate(blocks, axis=0)   # ~144 KiB f32 for this config
        self.layout = tuple(layout)

        # TODO(synk): for very large batches (B >> 10^4) a batch-on-lanes transposed
        # layout (features x batch) would avoid writing the padded 128-wide output.

    def __call__(self, z, command):
        out = hyper_mlp_pallas(z, command, self.packed, self.layout, self.wmax)
        kernel_w = out[:, : self.total_el_w].reshape(
            -1, self.out_size_w[0], self.out_size_w[1])
        kernel_b = out[:, self.total_el_w : self.out_true].reshape(-1, self.out_size_b)
        return kernel_w, kernel_b


# ------------------------------ reference --------------------------------------
def _mlp_ref(x, params):
    h = x
    for i, (w, b) in enumerate(params):
        h = h @ w + b
        if i < len(params) - 1:
            h = jnp.maximum(h, 0.0)
    return h


if __name__ == "__main__":
    key = jax.random.PRNGKey(0)
    k_model, k_z, k_c, k_z2, k_c2 = jax.random.split(key, 5)

    batch = 2
    z_dim = 7
    cmd_dim = 1
    in_dim = z_dim + cmd_dim          # dim of cat([z, command], dim=1)
    hidden_sizes = (32, 32)

    net = HyperNetworkPallas(hidden_sizes, z_dim_w=in_dim, z_dim_b=in_dim,
                             out_size_w=(8, 8), out_size_b=8, key=k_model)

    # --- small-batch (grid-less) path ---
    z = jax.random.normal(k_z, (batch, z_dim), jnp.float32)
    command = jax.random.normal(k_c, (batch, cmd_dim), jnp.float32)

    kernel_w, kernel_b = net(z, command)
    kernel_w = jax.block_until_ready(kernel_w)
    kernel_b = jax.block_until_ready(kernel_b)

    assert kernel_w.shape == (batch, 8, 8), kernel_w.shape
    assert kernel_b.shape == (batch, 8), kernel_b.shape

    x = jnp.concatenate([z, command], axis=1)
    ref_w = _mlp_ref(x, net.params_w).reshape(-1, 8, 8)
    ref_b = _mlp_ref(x, net.params_b).reshape(-1, 8)
    assert jnp.allclose(kernel_w, ref_w, atol=1e-5, rtol=1e-5)
    assert jnp.allclose(kernel_b, ref_b, atol=1e-5, rtol=1e-5)

    # --- large-batch (batch-tiled, parallel-grid) path ---
    big_batch = 8192
    z2 = jax.random.normal(k_z2, (big_batch, z_dim), jnp.float32)
    command2 = jax.random.normal(k_c2, (big_batch, cmd_dim), jnp.float32)

    kw2, kb2 = net(z2, command2)
    kw2 = jax.block_until_ready(kw2)
    kb2 = jax.block_until_ready(kb2)

    x2 = jnp.concatenate([z2, command2], axis=1)
    ref_w2 = _mlp_ref(x2, net.params_w).reshape(-1, 8, 8)
    ref_b2 = _mlp_ref(x2, net.params_b).reshape(-1, 8)
    assert kw2.shape == (big_batch, 8, 8), kw2.shape
    assert kb2.shape == (big_batch, 8), kb2.shape
    assert jnp.allclose(kw2, ref_w2, atol=1e-5, rtol=1e-5)
    assert jnp.allclose(kb2, ref_b2, atol=1e-5, rtol=1e-5)

    print("KERNEL_OK")
</pallas_src>

<mosaic_0001>
module attributes {stable_mosaic.version = 11 : i64} {
  func.func @_hyper_kernel(%arg0: memref<2x7xf32, #tpu.memory_space<vmem>>, %arg1: memref<2x1xf32, #tpu.memory_space<vmem>>, %arg2: memref<288x128xf32, #tpu.memory_space<vmem>>, %arg3: memref<2x128xf32, #tpu.memory_space<vmem>>) attributes {dimension_semantics = [], scalar_prefetch = 0 : i64, scratch_operands = 0 : i64, tpu.core_type = #tpu.core_type<tc>} {
    %c0 = arith.constant 0 : index
    %c0_0 = arith.constant 0 : index
    %0 = vector.load %arg2[%c0, %c0_0] : memref<288x128xf32, #tpu.memory_space<vmem>>, vector<7x128xf32>
    %c8 = arith.constant 8 : index
    %c0_1 = arith.constant 0 : index
    %1 = vector.load %arg2[%c8, %c0_1] : memref<288x128xf32, #tpu.memory_space<vmem>>, vector<1x128xf32>
    %c0_2 = arith.constant 0 : index
    %c0_3 = arith.constant 0 : index
    %2 = vector.load %arg0[%c0_2, %c0_3] : memref<2x7xf32, #tpu.memory_space<vmem>>, vector<2x7xf32>
    %cst = arith.constant dense<0.000000e+00> : vector<2x128xf32>
    %3 = tpu.matmul %2, %0, %cst {dimension_numbers = #tpu.dot_dimension_numbers<[1], [0], [0], [1], [0, 0, 1, 1], [], []>} : vector<2x7xf32>, vector<7x128xf32>, vector<2x128xf32> -> vector<2x128xf32>
    %c7 = arith.constant 7 : index
    %c0_4 = arith.constant 0 : index
    %4 = vector.load %arg2[%c7, %c0_4] : memref<288x128xf32, #tpu.memory_space<vmem>>, vector<1x128xf32>
    %c0_5 = arith.constant 0 : index
    %c0_6 = arith.constant 0 : index
    %5 = vector.load %arg1[%c0_5, %c0_6] : memref<2x1xf32, #tpu.memory_space<vmem>>, vector<2x1xf32>
    %6 = vector.broadcast %5 : vector<2x1xf32> to vector<2x128xf32>
    %7 = vector.broadcast %4 : vector<1x128xf32> to vector<2x128xf32>
    %8 = arith.mulf %6, %7 : vector<2x128xf32>
    %9 = arith.addf %3, %8 : vector<2x128xf32>
    %10 = vector.broadcast %1 : vector<1x128xf32> to vector<2x128xf32>
    %11 = arith.addf %9, %10 : vector<2x128xf32>
    %cst_7 = arith.constant 0.000000e+00 : f32
    %12 = vector.broadcast %cst_7 : f32 to vector<2x128xf32>
    %13 = arith.maximumf %11, %12 : vector<2x128xf32>
    %c16 = arith.constant 16 : index
    %c0_8 = arith.constant 0 : index
    %14 = vector.load %arg2[%c16, %c0_8] : memref<288x128xf32, #tpu.memory_space<vmem>>, vector<128x128xf32>
    %c144 = arith.constant 144 : index
    %c0_9 = arith.constant 0 : index
    %15 = vector.load %arg2[%c144, %c0_9] : memref<288x128xf32, #tpu.memory_space<vmem>>, vector<1x128xf32>
    %cst_10 = arith.constant dense<0.000000e+00> : vector<2x128xf32>
    %16 = tpu.matmul %13, %14, %cst_10 {dimension_numbers = #tpu.dot_dimension_numbers<[1], [0], [0], [1], [0, 0, 1, 1], [], []>} : vector<2x128xf32>, vector<128x128xf32>, vector<2x128xf32> -> vector<2x128xf32>
    %17 = vector.broadcast %15 : vector<1x128xf32> to vector<2x128xf32>
    %18 = arith.addf %16, %17 : vector<2x128xf32>
    %cst_11 = arith.constant 0.000000e+00 : f32
    %19 = vector.broadcast %cst_11 : f32 to vector<2x128xf32>
    %20 = arith.maximumf %18, %19 : vector<2x128xf32>
    %c152 = arith.constant 152 : index
    %c0_12 = arith.constant 0 : index
    %21 = vector.load %arg2[%c152, %c0_12] : memref<288x128xf32, #tpu.memory_space<vmem>>, vector<128x128xf32>
    %c280 = arith.constant 280 : index
    %c0_13 = arith.constant 0 : index
    %22 = vector.load %arg2[%c280, %c0_13] : memref<288x128xf32, #tpu.memory_space<vmem>>, vector<1x128xf32>
    %cst_14 = arith.constant dense<0.000000e+00> : vector<2x128xf32>
    %23 = tpu.matmul %20, %21, %cst_14 {dimension_numbers = #tpu.dot_dimension_numbers<[1], [0], [0], [1], [0, 0, 1, 1], [], []>} : vector<2x128xf32>, vector<128x128xf32>, vector<2x128xf32> -> vector<2x128xf32>
    %24 = vector.broadcast %22 : vector<1x128xf32> to vector<2x128xf32>
    %25 = arith.addf %23, %24 : vector<2x128xf32>
    %c0_15 = arith.constant 0 : index
    %c0_16 = arith.constant 0 : index
    %26 = vector.load %arg3[%c0_15, %c0_16] : memref<2x128xf32, #tpu.memory_space<vmem>>, vector<2x128xf32>
    tpu.vector_store %arg3[%c0_15, %c0_16], %25 {strides = array<i32>} : memref<2x128xf32, #tpu.memory_space<vmem>>, vector<2x128xf32>,
    return
  }
}

</mosaic_0001>

<llo_original>
// kernel: tpu_custom_call.1
$region0: #{tpu_custom_call.1}
  #allocation0 [shape = 'u32[]', space=smem, size = 0x4, offset = 0x4, fixed_abs, tag = 'smem constant byte address 0x4 - core index']
  #allocation1 [shape = 'u32[72,128]{1,0:T(1,128)}', space=vmem, size = 0x9000, scoped, tag = 'internal scratch']
  %s0 = inlined_call_operand.vmem [shape: f32[2,7], index: 0, kind: input, shape index: {}]
  %s1 = inlined_call_operand.vmem [shape: f32[2,1], index: 1, kind: input, shape index: {}]
  %s2 = inlined_call_operand.hbm [shape: f32[288,128], index: 2, kind: input, shape index: {}]
  %s3 = inlined_call_operand.hbm [shape: f32[2,128], index: 3, kind: output, shape index: {}]
  %s4 = sld [smem:[#allocation0]]
  $region26: #{tpu_custom_call.1} parent=0
    _
  %s6 = ssub.s32 1, %s4
  %s7 = scalar_select 0, %s6, %s4
  $region1: #{tpu_custom_call.1} parent=0
    #allocation2 [shape = 'u8[147456]{0}', space=vmem, size = 0x24000, scoped, tag = 'input window, operand 2, single buffered']
    #allocation3 [shape = 's32[1]{0}', space=sflag, size = 0x4, scoped, tag = 'scoped memory for tpu_custom_call.1']
    #allocation4 [shape = 's32[1]{0}', space=sflag, size = 0x4, scoped, tag = 'scoped memory for tpu_custom_call.1']
    #allocation5 [shape = 'u8[1024]{0}', space=vmem, size = 0x400, scoped, tag = 'output window, operand 0, single buffered']
    %8 = vsyncpa [#allocation3], 0
    %9 = vsyncpa [#allocation4], 0
    // Predicated region
    $region2: #{tpu_custom_call.1} parent=1 // pred_check
      _
    $region3: #{tpu_custom_call.1} parent=1 // pred_check_branch
      %11 = sbr.rel (0) target = $region5
    $region4: #{tpu_custom_call.1} parent=1 // pred_region
      _
    $region5: #{tpu_custom_call.1} parent=1 // pred_fallthru
      _
    // Predicated region
    $region6: #{tpu_custom_call.1} parent=1 // pred_check
      _
    $region7: #{tpu_custom_call.1} parent=1 // pred_check_branch
      %13 = sbr.rel (0) target = $region9
    $region8: #{tpu_custom_call.1} parent=1 // pred_region
      _
    $region9: #{tpu_custom_call.1} parent=1 // pred_fallthru
      _
    // Predicated region
    $region10: #{tpu_custom_call.1} parent=1 // pred_check
      _
    $region11: #{tpu_custom_call.1} parent=1 // pred_check_branch
      %15 = sbr.rel (0) target = $region13
    $region12: #{tpu_custom_call.1} parent=1 // pred_region
      %17 = vsyncadd [#allocation3], 0
      %s18 = sshll.u32 %s2, 4
      %s19 = int_to_ptr.hbm [resolvable:$true] %s18
      %s20 = sshll.u32 [#allocation2], 4
      %s21 = int_to_ptr.vmem [resolvable:$true] %s20
      %26 = dma.hbm_to_vmem [thread:$0]  %s19, 4608, %s21, [#allocation3], 128, 128, 8
    $region13: #{tpu_custom_call.1} parent=1 // pred_fallthru
      _
    // Predicated region
    $region14: #{tpu_custom_call.1} parent=1 // pred_check
      _
    $region15: #{tpu_custom_call.1} parent=1 // pred_check_branch
      %28 = sbr.rel (0) target = $region17
    $region16: #{tpu_custom_call.1} parent=1 // pred_region
      %30 = dma.done [#allocation3], 4608
    $region17: #{tpu_custom_call.1} parent=1 // pred_fallthru
      _
    %v31 = vld [vmem:[#allocation2] sm:$0x7f]
    %v32 = vld [vmem:[#allocation2 + $0x8] sm:$0x1]
    %v33 = vld [vmem:[%s0] sm:$0x3]
    %v34 = vld [vmem:[#allocation2 + $0x7] sm:$0x1]
    %v35 = vld [vmem:[%s1] sm:$0x3]
    %37 = vset.pattern.permute.xlu0 0
    %38 = vperm.xlu0 %37, %v35
    %v39 = vpop.permute.xlu0 %38
    %v41 = vperm.slane %v34, 0
    %v42 = vmul.f32 %v39, %v41
    %vm43 = vcmask 56320
    %v45 = vsel %vm43, %v33, 0
    %vm47 = vcmask 1046528
    %v49 = vsel %vm47, %v31, 0
    %51 = vmatpush.msra.mxu0 0.0
    %52 = vmatpush.msra.mxu0 0.0
    %53 = vmatpush.msra.mxu0 0.0
    %54 = vmatpush.msra.mxu0 0.0
    %55 = vmatpush.msra.mxu0 0.0
    %56 = vmatpush.msra.mxu0 0.0
    %57 = vmatpush.msra.mxu0 0.0
    %58 = vmatpush.msra.mxu0 0.0
    %59 = vmatpush.msra.mxu0 0.0
    %60 = vmatpush.msra.mxu0 0.0
    %61 = vmatpush.msra.mxu0 0.0
    %62 = vmatpush.msra.mxu0 0.0
    %63 = vmatpush.msra.mxu0 0.0
    %64 = vmatpush.msra.mxu0 0.0
    %65 = vmatpush.msra.mxu0 0.0
    %66 = vmatpush.msra.mxu0 %v49
    %67 = vmatmul.f32.gmra.mxu0 %v45
    %v68 = vpop.f32.mrf.mxu0
    %v69 = vadd.f32 %v42, %v68
    %70 = vdwg.mxu0
    %v71 = vperm.slane %v32, 0
    %v72 = vadd.f32 %v69, %v71
    %v73 = vmax.f32 %v72, 0.0
    %v74 = vld [vmem:[#allocation2 + $0x10] sm:$0xff]
    %v75 = vld [vmem:[#allocation2 + $0x18] sm:$0xff]
    %v76 = vld [vmem:[#allocation2 + $0x20] sm:$0xff]
    %v77 = vld [vmem:[#allocation2 + $0x28] sm:$0xff]
    %v78 = vld [vmem:[#allocation2 + $0x30] sm:$0xff]
    %v79 = vld [vmem:[#allocation2 + $0x38] sm:$0xff]
    %v80 = vld [vmem:[#allocation2 + $0x40] sm:$0xff]
    %v81 = vld [vmem:[#allocation2 + $0x48] sm:$0xff]
    %v82 = vld [vmem:[#allocation2 + $0x50] sm:$0xff]
    %v83 = vld [vmem:[#allocation2 + $0x58] sm:$0xff]
    %v84 = vld [vmem:[#allocation2 + $0x60] sm:$0xff]
    %v85 = vld [vmem:[#allocation2 + $0x68] sm:$0xff]
    %v86 = vld [vmem:[#allocation2 + $0x70] sm:$0xff]
    %v87 = vld [vmem:[#allocation2 + $0x78] sm:$0xff]
    %v88 = vld [vmem:[#allocation2 + $0x80] sm:$0xff]
    %v89 = vld [vmem:[#allocation2 + $0x88] sm:$0xff]
    %v90 = vld [vmem:[#allocation2 + $0x90] sm:$0x1]
    %v91 = vperm.slane %v90, 0
    %92 = vmatpush.msra.mxu0 %v89
    %93 = vmatpush.msra.mxu0 %v88
    %94 = vmatpush.msra.mxu0 %v87
    %95 = vmatpush.msra.mxu0 %v86
    %96 = vmatpush.msra.mxu0 %v85
    %97 = vmatpush.msra.mxu0 %v84
    %98 = vmatpush.msra.mxu0 %v83
    %99 = vmatpush.msra.mxu0 %v82
    %100 = vmatpush.msra.mxu0 %v81
    %101 = vmatpush.msra.mxu0 %v80
    %102 = vmatpush.msra.mxu0 %v79
    %103 = vmatpush.msra.mxu0 %v78
    %104 = vmatpush.msra.mxu0 %v77
    %105 = vmatpush.msra.mxu0 %v76
    %106 = vmatpush.msra.mxu0 %v75
    %107 = vmatpush.msra.mxu0 %v74
    %108 = vmatmul.f32.gmra.mxu0 %v73
    %v109 = vpop.f32.mrf.mxu0
    %v110 = vadd.f32 %v91, %v109
    %111 = vdwg.mxu0
    %v112 = vmax.f32 %v110, 0.0
    %v113 = vld [vmem:[#allocation2 + $0x98] sm:$0xff]
    %v114 = vld [vmem:[#allocation2 + $0xa0] sm:$0xff]
    %v115 = vld [vmem:[#allocation2 + $0xa8] sm:$0xff]
    %v116 = vld [vmem:[#allocation2 + $0xb0] sm:$0xff]
    %v117 = vld [vmem:[#allocation2 + $0xb8] sm:$0xff]
    %v118 = vld [vmem:[#allocation2 + $0xc0] sm:$0xff]
    %v119 = vld [vmem:[#allocation2 + $0xc8] sm:$0xff]
    %v120 = vld [vmem:[#allocation2 + $0xd0] sm:$0xff]
    %v121 = vld [vmem:[#allocation2 + $0xd8] sm:$0xff]
    %v122 = vld [vmem:[#allocation2 + $0xe0] sm:$0xff]
    %v123 = vld [vmem:[#allocation2 + $0xe8] sm:$0xff]
    %v124 = vld [vmem:[#allocation2 + $0xf0] sm:$0xff]
    %v125 = vld [vmem:[#allocation2 + $0xf8] sm:$0xff]
    %v126 = vld [vmem:[#allocation2 + $0x100] sm:$0xff]
    %v127 = vld [vmem:[#allocation2 + $0x108] sm:$0xff]
    %v128 = vld [vmem:[#allocation2 + $0x110] sm:$0xff]
    %v129 = vld [vmem:[#allocation2 + $0x118] sm:$0x1]
    %v130 = vperm.slane %v129, 0
    %131 = vmatpush.msra.mxu0 %v128
    %132 = vmatpush.msra.mxu0 %v127
    %133 = vmatpush.msra.mxu0 %v126
    %134 = vmatpush.msra.mxu0 %v125
    %135 = vmatpush.msra.mxu0 %v124
    %136 = vmatpush.msra.mxu0 %v123
    %137 = vmatpush.msra.mxu0 %v122
    %138 = vmatpush.msra.mxu0 %v121
    %139 = vmatpush.msra.mxu0 %v120
    %140 = vmatpush.msra.mxu0 %v119
    %141 = vmatpush.msra.mxu0 %v118
    %142 = vmatpush.msra.mxu0 %v117
    %143 = vmatpush.msra.mxu0 %v116
    %144 = vmatpush.msra.mxu0 %v115
    %145 = vmatpush.msra.mxu0 %v114
    %146 = vmatpush.msra.mxu0 %v113
    %147 = vmatmul.f32.gmra.mxu0 %v112
    %v148 = vpop.f32.mrf.mxu0
    %v149 = vadd.f32 %v130, %v148
    %150 = vdwg.mxu0
    %151 = vst [vmem:[#allocation5] sm:$0x3] %v149
    // Predicated region
    $region18: #{tpu_custom_call.1} parent=1 // pred_check
      _
    $region19: #{tpu_custom_call.1} parent=1 // pred_check_branch
      %153 = sbr.rel (0) target = $region21
    $region20: #{tpu_custom_call.1} parent=1 // pred_region
      %155 = vsyncadd [#allocation4], 0
      %s157 = sshll.u32 [#allocation5], 4
      %s158 = int_to_ptr.vmem [resolvable:$true] %s157
      %s159 = sshll.u32 %s3, 4
      %s160 = int_to_ptr.hbm [resolvable:$true] %s159
      %162 = dma.vmem_to_hbm [thread:$0]  %s158, 32, %s160, [#allocation4]
    $region21: #{tpu_custom_call.1} parent=1 // pred_fallthru
      _
    // Predicated region
    $region22: #{tpu_custom_call.1} parent=1 // pred_check
      _
    $region23: #{tpu_custom_call.1} parent=1 // pred_check_branch
      %164 = sbr.rel (0) target = $region25
    $region24: #{tpu_custom_call.1} parent=1 // pred_region
      %166 = dma.done [#allocation4], 32
    $region25: #{tpu_custom_call.1} parent=1 // pred_fallthru
      _
    %167 = vsyncpa [#allocation3], 1
    %168 = vsyncpa [#allocation4], 1

</llo_original>
